<compile_context>
chip_gen: v7x
topology: tpu7x:2x2x1
jax: 0.10.0
libtpu: 0.0.40
codegen_flags: <defaults>
</compile_context>

<pallas_src>
import jax
import jax.numpy as jnp
from jax.experimental import pallas as pl
from jax.experimental.pallas import tpu as pltpu

EPS = 1e-5
_MAX_TILE_N = 2048  # lane-axis tile; multiple of 128, fits all TPU generations


def _round_up(a, b):
    return ((a + b - 1) // b) * b


# ---------------------------------------------------------------------------
# Pass 1: per-feature sum and sum-of-squares of y = W @ x  (reduction over N)
# ---------------------------------------------------------------------------
def _stats_kernel(x_ref, w_ref, sum_ref, sumsq_ref):
    # x_ref: (Fin, tile_n), w_ref: (Fout, Fin)
    # sum_ref / sumsq_ref: (Fout, 1) resident accumulators across the grid.
    @pl.when(pl.program_id(0) == 0)
    def _():
        sum_ref[...] = jnp.zeros_like(sum_ref)
        sumsq_ref[...] = jnp.zeros_like(sumsq_ref)

    y = jnp.dot(w_ref[...], x_ref[...],
                preferred_element_type=jnp.float32)          # (Fout, tile_n)
    sum_ref[...] += jnp.sum(y, axis=1, keepdims=True)         # XLU cross-lane
    sumsq_ref[...] += jnp.sum(y * y, axis=1, keepdims=True)


# ---------------------------------------------------------------------------
# Pass 2: y = W_norm @ x + shift, ReLU  (normalization folded into W / shift)
# ---------------------------------------------------------------------------
def _normalize_kernel(x_ref, wn_ref, shift_ref, o_ref):
    # x_ref: (Fin, tile_n), wn_ref: (Fout, Fin), shift_ref: (Fout, 1)
    y = jnp.dot(wn_ref[...], x_ref[...],
                preferred_element_type=jnp.float32)           # (Fout, tile_n)
    o_ref[...] = jnp.maximum(y + shift_ref[...], 0.0).astype(o_ref.dtype)


def point_feature_net(x, weight, bias, gamma, beta):
    """x: (N, Fin) f32; weight: (Fout, Fin); bias/gamma/beta: (Fout,).

    Note: `bias` is accepted for API parity with the PyTorch module but is not
    used — under train-mode BatchNorm the linear bias cancels exactly.
    """
    del bias  # cancels exactly under BatchNorm batch statistics
    n_points, in_features = x.shape
    out_features = weight.shape[0]

    # Lane-dense transposed layout + pad N up to a tile multiple.
    tile_n = min(_MAX_TILE_N, _round_up(n_points, 128))
    n_pad = _round_up(n_points, tile_n)
    x_t = jnp.transpose(x)                                     # (Fin, N)
    if n_pad > n_points:
        x_t = jnp.pad(x_t, ((0, 0), (0, n_pad - n_points)))
    grid = (n_pad // tile_n,)

    w = weight.astype(jnp.float32)

    # ---- Pass 1: batch statistics -----------------------------------------
    ssum, ssq = pl.pallas_call(
        _stats_kernel,
        out_shape=(
            jax.ShapeDtypeStruct((out_features, 1), jnp.float32),
            jax.ShapeDtypeStruct((out_features, 1), jnp.float32),
        ),
        grid=grid,
        in_specs=[
            pl.BlockSpec((in_features, tile_n), lambda i: (0, i)),
            pl.BlockSpec((out_features, in_features), lambda i: (0, 0)),
        ],
        out_specs=(
            pl.BlockSpec((out_features, 1), lambda i: (0, 0)),
            pl.BlockSpec((out_features, 1), lambda i: (0, 0)),
        ),
        compiler_params=pltpu.CompilerParams(
            dimension_semantics=("arbitrary",)),
    )(x_t, w)

    # ---- Host-side: mean / biased var / fold BN affine into W and a shift --
    inv_n = 1.0 / float(n_points)
    mean = ssum * inv_n                                        # (Fout, 1)
    var = jnp.maximum(ssq * inv_n - mean * mean, 0.0)          # biased var
    scale = gamma.reshape(out_features, 1) * jax.lax.rsqrt(var + EPS)
    shift = beta.reshape(out_features, 1) - scale * mean
    w_norm = w * scale                                         # (Fout, Fin)

    # ---- Pass 2: normalize + ReLU (parallel over N tiles / megacore) -------
    out_t = pl.pallas_call(
        _normalize_kernel,
        out_shape=jax.ShapeDtypeStruct((out_features, n_pad), jnp.float32),
        grid=grid,
        in_specs=[
            pl.BlockSpec((in_features, tile_n), lambda i: (0, i)),
            pl.BlockSpec((out_features, in_features), lambda i: (0, 0)),
            pl.BlockSpec((out_features, 1), lambda i: (0, 0)),
        ],
        out_specs=pl.BlockSpec((out_features, tile_n), lambda i: (0, i)),
        compiler_params=pltpu.CompilerParams(
            dimension_semantics=("parallel",)),
    )(x_t, w_norm, shift)

    # Drop padded columns, return in the module's (N, Fout) layout.
    return jnp.transpose(out_t[:, :n_points])


# ---------------------------------------------------------------------------
# Pure-JAX reference (matches PyTorch train-mode forward, including the bias)
# ---------------------------------------------------------------------------
def reference(x, weight, bias, gamma, beta):
    y = x @ weight.T + bias
    mean = jnp.mean(y, axis=0, keepdims=True)
    var = jnp.mean((y - mean) ** 2, axis=0, keepdims=True)     # biased
    y = (y - mean) / jnp.sqrt(var + EPS)
    y = y * gamma + beta
    return jnp.maximum(y, 0.0)


if __name__ == "__main__":
    in_features, out_features = 8, 32

    key = jax.random.PRNGKey(0)
    kx, kw, kb, kx2 = jax.random.split(key, 4)

    bound = 1.0 / (in_features ** 0.5)
    weight = jax.random.uniform(
        kw, (out_features, in_features), minval=-bound, maxval=bound,
        dtype=jnp.float32)
    bias = jax.random.uniform(
        kb, (out_features,), minval=-bound, maxval=bound, dtype=jnp.float32)
    gamma = jnp.ones((out_features,), dtype=jnp.float32)
    beta = jnp.zeros((out_features,), dtype=jnp.float32)

    # Case 1: N a multiple of 128 (no padding path).
    n_points = 256
    x = jax.random.normal(kx, (n_points, in_features), dtype=jnp.float32)
    out = jax.block_until_ready(point_feature_net(x, weight, bias, gamma, beta))
    ref = reference(x, weight, bias, gamma, beta)
    assert out.shape == (n_points, out_features)
    assert jnp.allclose(out, ref, atol=1e-4, rtol=1e-4), (
        float(jnp.max(jnp.abs(out - ref))))

    # Case 2: ragged N (exercises zero-padding + stat correction).
    n_points2 = 300
    x2 = jax.random.normal(kx2, (n_points2, in_features), dtype=jnp.float32)
    out2 = jax.block_until_ready(
        point_feature_net(x2, weight, bias, gamma, beta))
    ref2 = reference(x2, weight, bias, gamma, beta)
    assert out2.shape == (n_points2, out_features)
    assert jnp.allclose(out2, ref2, atol=1e-4, rtol=1e-4), (
        float(jnp.max(jnp.abs(out2 - ref2))))

    print("KERNEL_OK")
</pallas_src>

<mosaic_0001>
module attributes {stable_mosaic.version = 11 : i64} {
  func.func @_stats_kernel(%arg0: i32, %arg1: memref<8x256xf32, #tpu.memory_space<vmem>>, %arg2: memref<32x8xf32, #tpu.memory_space<vmem>>, %arg3: memref<32x1xf32, #tpu.memory_space<vmem>>, %arg4: memref<32x1xf32, #tpu.memory_space<vmem>>) attributes {dimension_semantics = [#tpu.dimension_semantics<arbitrary>], iteration_bounds = array<i64: 1>, scalar_prefetch = 0 : i64, scratch_operands = 0 : i64, tpu.core_type = #tpu.core_type<tc>, window_params = [{transform_indices = @transform_0, window_bounds = array<i64: 8, 256>}, {pipeline_mode = #tpu.pipeline_mode<synchronous>, transform_indices = @transform_1, window_bounds = array<i64: 32, 8>}, {pipeline_mode = #tpu.pipeline_mode<synchronous>, transform_indices = @transform_2, window_bounds = array<i64: 32, 1>}, {pipeline_mode = #tpu.pipeline_mode<synchronous>, transform_indices = @transform_3, window_bounds = array<i64: 32, 1>}]} {
    %c0_i32 = arith.constant 0 : i32
    %0 = arith.cmpi eq, %arg0, %c0_i32 : i32
    %1 = arith.extui %0 : i1 to i32
    %c0_i32_0 = arith.constant 0 : i32
    %2 = arith.cmpi ne, %1, %c0_i32_0 : i32
    scf.if %2 {
      %cst_14 = arith.constant 0.000000e+00 : f32
      %17 = vector.broadcast %cst_14 : f32 to vector<32x1xf32>
      %c0_15 = arith.constant 0 : index
      %c0_16 = arith.constant 0 : index
      %18 = vector.load %arg3[%c0_15, %c0_16] : memref<32x1xf32, #tpu.memory_space<vmem>>, vector<32x1xf32>
      tpu.vector_store %arg3[%c0_15, %c0_16], %17 {strides = array<i32>} : memref<32x1xf32, #tpu.memory_space<vmem>>, vector<32x1xf32>,
      %cst_17 = arith.constant 0.000000e+00 : f32
      %19 = vector.broadcast %cst_17 : f32 to vector<32x1xf32>
      %c0_18 = arith.constant 0 : index
      %c0_19 = arith.constant 0 : index
      %20 = vector.load %arg4[%c0_18, %c0_19] : memref<32x1xf32, #tpu.memory_space<vmem>>, vector<32x1xf32>
      tpu.vector_store %arg4[%c0_18, %c0_19], %19 {strides = array<i32>} : memref<32x1xf32, #tpu.memory_space<vmem>>, vector<32x1xf32>,
    } else {
    }
    %c0 = arith.constant 0 : index
    %c0_1 = arith.constant 0 : index
    %3 = vector.load %arg2[%c0, %c0_1] : memref<32x8xf32, #tpu.memory_space<vmem>>, vector<32x8xf32>
    %c0_2 = arith.constant 0 : index
    %c0_3 = arith.constant 0 : index
    %4 = vector.load %arg1[%c0_2, %c0_3] : memref<8x256xf32, #tpu.memory_space<vmem>>, vector<8x256xf32>
    %cst = arith.constant dense<0.000000e+00> : vector<32x256xf32>
    %5 = tpu.matmul %3, %4, %cst {dimension_numbers = #tpu.dot_dimension_numbers<[1], [0], [0], [1], [0, 0, 1, 1], [], []>} : vector<32x8xf32>, vector<8x256xf32>, vector<32x256xf32> -> vector<32x256xf32>
    %c0_4 = arith.constant 0 : index
    %c0_5 = arith.constant 0 : index
    %6 = vector.load %arg3[%c0_4, %c0_5] : memref<32x1xf32, #tpu.memory_space<vmem>>, vector<32x1xf32>
    %cst_6 = arith.constant dense<0.000000e+00> : vector<32xf32>
    %7 = vector.multi_reduction <add>, %5, %cst_6 [1] : vector<32x256xf32> to vector<32xf32>
    %8 = vector.shape_cast %7 : vector<32xf32> to vector<32x1xf32>
    %9 = arith.addf %6, %8 : vector<32x1xf32>
    %c0_7 = arith.constant 0 : index
    %c0_8 = arith.constant 0 : index
    %10 = vector.load %arg3[%c0_7, %c0_8] : memref<32x1xf32, #tpu.memory_space<vmem>>, vector<32x1xf32>
    tpu.vector_store %arg3[%c0_7, %c0_8], %9 {strides = array<i32>} : memref<32x1xf32, #tpu.memory_space<vmem>>, vector<32x1xf32>,
    %c0_9 = arith.constant 0 : index
    %c0_10 = arith.constant 0 : index
    %11 = vector.load %arg4[%c0_9, %c0_10] : memref<32x1xf32, #tpu.memory_space<vmem>>, vector<32x1xf32>
    %12 = arith.mulf %5, %5 : vector<32x256xf32>
    %cst_11 = arith.constant dense<0.000000e+00> : vector<32xf32>
    %13 = vector.multi_reduction <add>, %12, %cst_11 [1] : vector<32x256xf32> to vector<32xf32>
    %14 = vector.shape_cast %13 : vector<32xf32> to vector<32x1xf32>
    %15 = arith.addf %11, %14 : vector<32x1xf32>
    %c0_12 = arith.constant 0 : index
    %c0_13 = arith.constant 0 : index
    %16 = vector.load %arg4[%c0_12, %c0_13] : memref<32x1xf32, #tpu.memory_space<vmem>>, vector<32x1xf32>
    tpu.vector_store %arg4[%c0_12, %c0_13], %15 {strides = array<i32>} : memref<32x1xf32, #tpu.memory_space<vmem>>, vector<32x1xf32>,
    return
  }
  func.func @transform_0(%arg0: i32) -> (i32, i32) {
    %c0_i32 = arith.constant 0 : i32
    %c0_i32_0 = arith.constant 0 : i32
    return %c0_i32, %arg0 : i32, i32
  }
  func.func @transform_1(%arg0: i32) -> (i32, i32) {
    %c0_i32 = arith.constant 0 : i32
    %c0_i32_0 = arith.constant 0 : i32
    %c0_i32_1 = arith.constant 0 : i32
    return %c0_i32, %c0_i32_0 : i32, i32
  }
  func.func @transform_2(%arg0: i32) -> (i32, i32) {
    %c0_i32 = arith.constant 0 : i32
    %c0_i32_0 = arith.constant 0 : i32
    %c0_i32_1 = arith.constant 0 : i32
    return %c0_i32, %c0_i32_0 : i32, i32
  }
  func.func @transform_3(%arg0: i32) -> (i32, i32) {
    %c0_i32 = arith.constant 0 : i32
    %c0_i32_0 = arith.constant 0 : i32
    %c0_i32_1 = arith.constant 0 : i32
    return %c0_i32, %c0_i32_0 : i32, i32
  }
}

</mosaic_0001>

<llo_original>
// kernel: tpu_custom_call.1
$region0: #{tpu_custom_call.1}
  #allocation0 [shape = 'u32[]', space=smem, size = 0x4, offset = 0x4, fixed_abs, tag = 'smem constant byte address 0x4 - core index']
  #allocation1 [shape = 'u32[144,128]{1,0:T(1,128)}', space=vmem, size = 0x12000, scoped, tag = 'internal scratch']
  %s0 = inlined_call_operand.vmem [shape: f32[8,256], index: 0, kind: input, shape index: {}]
  %s1 = inlined_call_operand.vmem [shape: f32[32,8], index: 1, kind: input, shape index: {}]
  %s2 = inlined_call_operand.vmem [shape: f32[32,1], index: 2, kind: output, shape index: {0}]
  %s3 = inlined_call_operand.vmem [shape: f32[32,1], index: 3, kind: output, shape index: {1}]
  %4 = xla_tuple %s2, %s3
  %s5 = sld [smem:[#allocation0]]
  $region30: #{tpu_custom_call.1} parent=0
    _
  %s7 = ssub.s32 1, %s5
  %s8 = scalar_select 0, %s7, %s5
  // Predicated region
  $region2: #{tpu_custom_call.1} parent=0 // pred_check
    _
  $region3: #{tpu_custom_call.1} parent=0 // pred_check_branch
    %10 = sbr.rel (0) target = $region5
  $region4: #{tpu_custom_call.1} parent=0 // pred_region
    _
  $region5: #{tpu_custom_call.1} parent=0 // pred_fallthru
    _
  // Predicated region
  $region6: #{tpu_custom_call.1} parent=0 // pred_check
    _
  $region7: #{tpu_custom_call.1} parent=0 // pred_check_branch
    %12 = sbr.rel (0) target = $region9
  $region8: #{tpu_custom_call.1} parent=0 // pred_region
    _
  $region9: #{tpu_custom_call.1} parent=0 // pred_fallthru
    _
  %p13 = scmp.eq.s32.totalorder 0, 0
  // Predicated region
  $region10: #{tpu_custom_call.1} parent=0 // pred_check
    %p14 = pneg %p13
  $region11: #{tpu_custom_call.1} parent=0 // pred_check_branch
    %16 = sbr.rel (%p14) target = $region13
  $region12: #{tpu_custom_call.1} parent=0 // pred_region
    %vm17 = vcmask 7168
    %18 = vst.msk [vmem:[%s2] sm:$0xff] %vm17, 0.0
    %19 = vst.msk [vmem:[%s2 + $0x8] sm:$0xff] %vm17, 0.0
    %20 = vst.msk [vmem:[%s2 + $0x10] sm:$0xff] %vm17, 0.0
    %21 = vst.msk [vmem:[%s2 + $0x18] sm:$0xff] %vm17, 0.0
    %22 = vst.msk [vmem:[%s3] sm:$0xff] %vm17, 0.0
    %23 = vst.msk [vmem:[%s3 + $0x8] sm:$0xff] %vm17, 0.0
    %24 = vst.msk [vmem:[%s3 + $0x10] sm:$0xff] %vm17, 0.0
    %25 = vst.msk [vmem:[%s3 + $0x18] sm:$0xff] %vm17, 0.0
  $region13: #{tpu_custom_call.1} parent=0 // pred_fallthru
    _
  %v26 = vld [vmem:[%s1] sm:$0xff]
  %v27 = vld [vmem:[%s1 + $0x8] sm:$0xff]
  %v28 = vld [vmem:[%s1 + $0x10] sm:$0xff]
  %v29 = vld [vmem:[%s1 + $0x18] sm:$0xff]
  %v30 = vld [vmem:[%s0] sm:$0xff]
  %v31 = vld [vmem:[%s0 + $0x8] sm:$0xff]
  %vm32 = vcmask 64512
  %v34 = vsel %vm32, %v26, 0
  %v37 = vsel %vm32, %v27, 0
  %v40 = vsel %vm32, %v28, 0
  %v43 = vsel %vm32, %v29, 0
  %45 = vmatprep.subr.mxu0 %v31
  %46 = vmatpush1.msra.mxu0 %v30
  %47 = vmatprep.subr.mxu0 0.0
  %48 = vmatpush1.msra.mxu0 0.0
  %49 = vmatprep.subr.mxu0 0.0
  %50 = vmatpush1.msra.mxu0 0.0
  %51 = vmatprep.subr.mxu0 0.0
  %52 = vmatpush1.msra.mxu0 0.0
  %53 = vmatprep.subr.mxu0 0.0
  %54 = vmatpush1.msra.mxu0 0.0
  %55 = vmatprep.subr.mxu0 0.0
  %56 = vmatpush1.msra.mxu0 0.0
  %57 = vmatprep.subr.mxu0 0.0
  %58 = vmatpush1.msra.mxu0 0.0
  %59 = vmatprep.subr.mxu0 0.0
  %60 = vmatpush1.msra.mxu0 0.0
  %61 = vmatprep.subr.mxu0 0.0
  %62 = vmatpush1.msra.mxu0 0.0
  %63 = vmatprep.subr.mxu0 0.0
  %64 = vmatpush1.msra.mxu0 0.0
  %65 = vmatprep.subr.mxu0 0.0
  %66 = vmatpush1.msra.mxu0 0.0
  %67 = vmatprep.subr.mxu0 0.0
  %68 = vmatpush1.msra.mxu0 0.0
  %69 = vmatprep.subr.mxu0 0.0
  %70 = vmatpush1.msra.mxu0 0.0
  %71 = vmatprep.subr.mxu0 0.0
  %72 = vmatpush1.msra.mxu0 0.0
  %73 = vmatprep.subr.mxu0 0.0
  %74 = vmatpush1.msra.mxu0 0.0
  %75 = vmatprep.subr.mxu0 0.0
  %76 = vmatpush1.msra.mxu0 0.0
  %77 = vmatprep.subr.mxu0 0.0
  %78 = vmatpush1.msra.mxu0 0.0
  %79 = vmatprep.subr.mxu0 0.0
  %80 = vmatpush1.msra.mxu0 0.0
  %81 = vmatprep.subr.mxu0 0.0
  %82 = vmatpush1.msra.mxu0 0.0
  %83 = vmatprep.subr.mxu0 0.0
  %84 = vmatpush1.msra.mxu0 0.0
  %85 = vmatprep.subr.mxu0 0.0
  %86 = vmatpush1.msra.mxu0 0.0
  %87 = vmatprep.subr.mxu0 0.0
  %88 = vmatpush1.msra.mxu0 0.0
  %89 = vmatprep.subr.mxu0 0.0
  %90 = vmatpush1.msra.mxu0 0.0
  %91 = vmatprep.subr.mxu0 0.0
  %92 = vmatpush1.msra.mxu0 0.0
  %93 = vmatprep.subr.mxu0 0.0
  %94 = vmatpush1.msra.mxu0 0.0
  %95 = vmatprep.subr.mxu0 0.0
  %96 = vmatpush1.msra.mxu0 0.0
  %97 = vmatprep.subr.mxu0 0.0
  %98 = vmatpush1.msra.mxu0 0.0
  %99 = vmatprep.subr.mxu0 0.0
  %100 = vmatpush1.msra.mxu0 0.0
  %101 = vmatprep.subr.mxu0 0.0
  %102 = vmatpush1.msra.mxu0 0.0
  %103 = vmatprep.subr.mxu0 0.0
  %104 = vmatpush1.msra.mxu0 0.0
  %105 = vmatprep.subr.mxu0 0.0
  %106 = vmatpush1.msra.mxu0 0.0
  %107 = vmatprep.subr.mxu0 0.0
  %108 = vmatpush1.msra.mxu0 0.0
  %109 = vmatprep.mubr.f32.mxu0 0.0
  %110 = vmatmul.mubr.f32.gmra.mrb[0].mxu0 %v34
  %v111 = vpop.f32.mrb[0].mxu0
  %v112 = vadd.f32 0.0, %v111
  %v113 = vpop.f32.mrb[0].mxu0
  %v114 = vadd.f32 0.0, %v113
  %115 = vmatprep.mubr.f32.mxu0 0.0
  %116 = vmatmul.mubr.f32.gmra.mrb[0].mxu0 %v37
  %v117 = vpop.f32.mrb[0].mxu0
  %v118 = vadd.f32 0.0, %v117
  %v119 = vpop.f32.mrb[0].mxu0
  %v120 = vadd.f32 0.0, %v119
  %121 = vmatprep.mubr.f32.mxu0 0.0
  %122 = vmatmul.mubr.f32.gmra.mrb[0].mxu0 %v40
  %v123 = vpop.f32.mrb[0].mxu0
  %v124 = vadd.f32 0.0, %v123
  %v125 = vpop.f32.mrb[0].mxu0
  %v126 = vadd.f32 0.0, %v125
  %127 = vmatprep.mubr.f32.mxu0 0.0
  %128 = vmatmul.mubr.f32.gmra.mrb[0].mxu0 %v43
  %v129 = vpop.f32.mrb[0].mxu0
  %v130 = vadd.f32 0.0, %v129
  %v131 = vpop.f32.mrb[0].mxu0
  %v132 = vadd.f32 0.0, %v131
  %133 = vdwg.mxu0
  %v134 = vld [vmem:[%s2] sm:$0xff]
  %v135 = vld [vmem:[%s2 + $0x8] sm:$0xff]
  %v136 = vld [vmem:[%s2 + $0x10] sm:$0xff]
  %v137 = vld [vmem:[%s2 + $0x18] sm:$0xff]
  %v138 = vadd.f32 %v112, %v114
  %139 = vadd.xlane.f32.xlu0 %v138
  %v140 = vpop.xlane.xlu0 %139
  %v141 = vadd.f32 %v118, %v120
  %142 = vadd.xlane.f32.xlu0 %v141
  %v143 = vpop.xlane.xlu0 %142
  %v144 = vadd.f32 %v124, %v126
  %145 = vadd.xlane.f32.xlu0 %v144
  %v146 = vpop.xlane.xlu0 %145
  %v147 = vadd.f32 %v130, %v132
  %148 = vadd.xlane.f32.xlu0 %v147
  %v149 = vpop.xlane.xlu0 %148
  %v150 = vadd.f32 %v134, %v140
  %v151 = vadd.f32 %v135, %v143
  %v152 = vadd.f32 %v136, %v146
  %v153 = vadd.f32 %v137, %v149
  %vm154 = vcmask 7168
  %155 = vst.msk [vmem:[%s2] sm:$0xff] %vm154, %v150
  %156 = vst.msk [vmem:[%s2 + $0x8] sm:$0xff] %vm154, %v151
  %157 = vst.msk [vmem:[%s2 + $0x10] sm:$0xff] %vm154, %v152
  %158 = vst.msk [vmem:[%s2 + $0x18] sm:$0xff] %vm154, %v153
  %v159 = vld [vmem:[%s3] sm:$0xff]
  %v160 = vld [vmem:[%s3 + $0x8] sm:$0xff]
  %v161 = vld [vmem:[%s3 + $0x10] sm:$0xff]
  %v162 = vld [vmem:[%s3 + $0x18] sm:$0xff]
  %v163 = vmul.f32 %v112, %v112
  %v164 = vmul.f32 %v114, %v114
  %v165 = vmul.f32 %v118, %v118
  %v166 = vmul.f32 %v120, %v120
  %v167 = vmul.f32 %v124, %v124
  %v168 = vmul.f32 %v126, %v126
  %v169 = vmul.f32 %v130, %v130
  %v170 = vmul.f32 %v132, %v132
  %v171 = vadd.f32 %v163, %v164
  %172 = vadd.xlane.f32.xlu0 %v171
  %v173 = vpop.xlane.xlu0 %172
  %v174 = vadd.f32 %v165, %v166
  %175 = vadd.xlane.f32.xlu0 %v174
  %v176 = vpop.xlane.xlu0 %175
  %v177 = vadd.f32 %v167, %v168
  %178 = vadd.xlane.f32.xlu0 %v177
  %v179 = vpop.xlane.xlu0 %178
  %v180 = vadd.f32 %v169, %v170
  %181 = vadd.xlane.f32.xlu0 %v180
  %v182 = vpop.xlane.xlu0 %181
  %v183 = vadd.f32 %v159, %v173
  %v184 = vadd.f32 %v160, %v176
  %v185 = vadd.f32 %v161, %v179
  %v186 = vadd.f32 %v162, %v182
  %187 = vst.msk [vmem:[%s3] sm:$0xff] %vm154, %v183
  %188 = vst.msk [vmem:[%s3 + $0x8] sm:$0xff] %vm154, %v184
  %189 = vst.msk [vmem:[%s3 + $0x10] sm:$0xff] %vm154, %v185
  %190 = vst.msk [vmem:[%s3 + $0x18] sm:$0xff] %vm154, %v186
  // Predicated region
  $region14: #{tpu_custom_call.1} parent=0 // pred_check
    _
  $region15: #{tpu_custom_call.1} parent=0 // pred_check_branch
    %192 = sbr.rel (0) target = $region17
  $region16: #{tpu_custom_call.1} parent=0 // pred_region
    _
  $region17: #{tpu_custom_call.1} parent=0 // pred_fallthru
    _
  // Predicated region
  $region18: #{tpu_custom_call.1} parent=0 // pred_check
    _
  $region19: #{tpu_custom_call.1} parent=0 // pred_check_branch
    %194 = sbr.rel (0) target = $region21
  $region20: #{tpu_custom_call.1} parent=0 // pred_region
    _
  $region21: #{tpu_custom_call.1} parent=0 // pred_fallthru
    _
  // Predicated region
  $region22: #{tpu_custom_call.1} parent=0 // pred_check
    _
  $region23: #{tpu_custom_call.1} parent=0 // pred_check_branch
    %196 = sbr.rel (0) target = $region25
  $region24: #{tpu_custom_call.1} parent=0 // pred_region
    _
  $region25: #{tpu_custom_call.1} parent=0 // pred_fallthru
    _
  // Predicated region
  $region26: #{tpu_custom_call.1} parent=0 // pred_check
    _
  $region27: #{tpu_custom_call.1} parent=0 // pred_check_branch
    %198 = sbr.rel (0) target = $region29
  $region28: #{tpu_custom_call.1} parent=0 // pred_region
    _
  $region29: #{tpu_custom_call.1} parent=0 // pred_fallthru
    _

</llo_original>
